<compile_context>
chip_gen: v7x
topology: tpu7x:2x2x1
jax: 0.10.0
libtpu: 0.0.40
codegen_flags: <defaults>
</compile_context>

<pallas_src>
import math

import jax
import jax.numpy as jnp
from jax.experimental import pallas as pl
from jax.experimental.pallas import tpu as pltpu


def _round_up(x, m):
    return ((x + m - 1) // m) * m


_TPU_CFG = None


def _tpu_config():
    """Generation-dependent tiling / VMEM budget (v5e / v6e / v7x aware)."""
    global _TPU_CFG
    if _TPU_CFG is not None:
        return _TPU_CFG
    kind = ""
    try:
        kind = jax.devices()[0].device_kind.lower()
    except Exception:
        pass
    if "v7" in kind or "7x" in kind:
        # 64 MiB VMEM per TC, 2 TCs/chip -> leave headroom, keep >=2 grid steps
        cfg = dict(row_tile=256, vmem_cap=56 << 20, min_grid=2)
    elif "v6" in kind:
        # 128 MiB VMEM, bf16 VPU/EUP -> big row tiles, generous budget
        cfg = dict(row_tile=1024, vmem_cap=104 << 20, min_grid=1)
    elif "v5" in kind:
        cfg = dict(row_tile=256, vmem_cap=100 << 20, min_grid=1)
    else:
        cfg = dict(row_tile=256, vmem_cap=56 << 20, min_grid=1)
    _TPU_CFG = cfg
    return cfg


def _pick_row_tile(rows, max_tile, *, min_grid=1, max_waste=0.125):
    """Row tile (multiple of 8) <= max_tile; keep pad waste small and, where
    possible, give the parallel grid at least `min_grid` steps (v7x: 2 TCs)."""
    tile = min(max(8, (max_tile // 8) * 8), _round_up(rows, 8))
    while tile > 8:
        rp = _round_up(rows, tile)
        if rp // tile >= min_grid and (rp - rows) / rp <= max_waste:
            break
        nxt = max(8, _round_up(max(tile // 2, 8), 8))
        tile = nxt if nxt < tile else tile - 8
    return tile


def _exact_row_tile(rows, cap, min_grid):
    """Largest tile that divides `rows` exactly (multiple of 8, or == rows),
    <= cap; prefers tiles that give at least `min_grid` grid steps."""
    cands = [d for d in range(8, min(cap, rows) + 1, 8) if rows % d == 0]
    if rows <= cap:
        cands.append(rows)
    if not cands:
        return None
    good = [d for d in cands if rows // d >= min_grid]
    return max(good) if good else max(cands)


# ---------------------------------------------------------------------------
# Pallas kernel 1: series decomposition (elementwise, HBM-bandwidth-bound)
#   season[i] = x_list[i + 1] - x_list[i]
# ---------------------------------------------------------------------------
def _decompose_kernel(*refs):
    n = (len(refs) + 1) // 2          # n inputs, n-1 outputs
    x_refs = refs[:n]
    o_refs = refs[n:]
    for i in range(n - 1):
        o_refs[i][...] = x_refs[i + 1][...] - x_refs[i][...]


def decompose_pallas(x_list, *, max_rows=1024):
    """x_list: list of N equally-shaped arrays. Returns list of N-1 differences."""
    cfg = _tpu_config()
    n = len(x_list)
    shape = x_list[0].shape
    dtype = x_list[0].dtype
    t = math.prod(shape)
    isz = jnp.dtype(dtype).itemsize

    # VMEM per grid step: (n inputs + n-1 outputs) x 2 buffers x tr x 128 x isz.
    bytes_per_row = (2 * n - 1) * 2 * 128 * isz
    tr_cap = max(8, min(max_rows,
                        (int(cfg["vmem_cap"] * 0.6) // bytes_per_row) // 8 * 8))

    # Fast path: element count already 128-aligned -> pure reshape (no pad /
    # crop HBM passes on this bandwidth-bound kernel).
    tr = None
    r0 = 0
    if t % 128 == 0:
        r0 = t // 128
        tr = _exact_row_tile(r0, tr_cap, cfg["min_grid"])
    if tr is not None:
        rp = r0
        flats = [x.reshape(rp, 128) for x in x_list]
        crop = False
    else:
        # TODO(synk): fold ragged-tail handling into the kernel to avoid this
        # pad/crop HBM pass for non-128-aligned element counts.
        r0 = -(-t // 128)
        tr = _pick_row_tile(r0, tr_cap, min_grid=cfg["min_grid"])
        rp = _round_up(r0, tr)
        pad = rp * 128 - t
        flats = [jnp.pad(x.reshape(-1), (0, pad)).reshape(rp, 128)
                 for x in x_list]
        crop = True

    est = (2 * n - 1) * 2 * tr * 128 * isz
    vmem_limit = int(min(max(est + (4 << 20), 32 << 20), cfg["vmem_cap"]))

    outs = pl.pallas_call(
        _decompose_kernel,
        out_shape=[jax.ShapeDtypeStruct((rp, 128), dtype) for _ in range(n - 1)],
        grid=(rp // tr,),
        in_specs=[pl.BlockSpec((tr, 128), lambda i: (i, 0)) for _ in range(n)],
        out_specs=[pl.BlockSpec((tr, 128), lambda i: (i, 0))
                   for _ in range(n - 1)],
        compiler_params=pltpu.CompilerParams(
            dimension_semantics=("parallel",),   # shards across TCs on v7x
            vmem_limit_bytes=vmem_limit),
    )(*flats)

    if crop:
        return [o.reshape(-1)[:t].reshape(shape) for o in outs]
    return [o.reshape(shape) for o in outs]


# ---------------------------------------------------------------------------
# Pallas kernel 2: fused MLP  (Linear -> GELU(exact, erf) -> Linear)
# Used for both `cross_layer` (H -> H -> H) and `out_cross_layer` (H -> H -> 2H).
# Matmul operands are fed in the weight dtype (bf16 -> MXU-native) with f32
# accumulation; the GELU epilogue is done in f32 on lane-dense (128-padded) data.
# ---------------------------------------------------------------------------
def _mlp_kernel(x_ref, w1_ref, b1_ref, w2_ref, b2_ref, o_ref):
    cd = w1_ref.dtype                      # bf16 weights -> bf16 MXU operands
    h = jnp.dot(x_ref[...].astype(cd), w1_ref[...],
                preferred_element_type=jnp.float32)
    h = h + b1_ref[...].astype(jnp.float32)
    # exact GELU (matches torch.nn.GELU() default, erf-based), f32 epilogue
    h = 0.5 * h * (1.0 + jax.lax.erf(h * (1.0 / math.sqrt(2.0))))
    # NOTE: activation is intentionally cast to the weight dtype (bf16) for the
    # second matmul -- documented precision / MXU-throughput tradeoff.
    o = jnp.dot(h.astype(cd), w2_ref[...], preferred_element_type=jnp.float32)
    o = o + b2_ref[...].astype(jnp.float32)
    o_ref[...] = o.astype(o_ref.dtype)


def mlp_pallas(x, w1, b1, w2, b2, *, out_features=None, tm=None):
    """x: (..., H_in). Fused Linear -> GELU -> Linear on the last dim.

    Weights may (and should, see __init__) be pre-padded: h_mid / h_out to
    multiples of 128 with biases shaped (1, padded). `out_features` is the
    logical output width (needed when w2 is pre-padded)."""
    cfg = _tpu_config()
    orig_shape = x.shape
    h_in = orig_shape[-1]
    m = math.prod(orig_shape[:-1])
    x2 = x.reshape(m, h_in)

    h_mid = w1.shape[1]
    h_out = w2.shape[1]
    if out_features is None:
        out_features = h_out
    h_mid_p = _round_up(h_mid, 128)
    h_out_p = _round_up(h_out, 128)

    # Lane-dense weights: pad h_mid / h_out to 128 multiples. Prefer passing
    # pre-padded weights (done once in __init__) so this is a no-op per call.
    if h_mid_p != h_mid:
        w1 = jnp.pad(w1, ((0, 0), (0, h_mid_p - h_mid)))
        b1 = jnp.pad(b1.reshape(-1), (0, h_mid_p - h_mid))
        w2 = jnp.pad(w2, ((0, h_mid_p - h_mid), (0, 0)))
    if h_out_p != h_out:
        w2 = jnp.pad(w2, ((0, 0), (0, h_out_p - h_out)))
        b2 = jnp.pad(b2.reshape(-1), (0, h_out_p - h_out))
    b1 = b1.reshape(1, h_mid_p)
    b2 = b2.reshape(1, h_out_p)

    x_isz = jnp.dtype(x.dtype).itemsize
    w_isz = jnp.dtype(w1.dtype).itemsize

    # Output-column (N) tiling: tile w2/b2/out when resident weights would not
    # fit the per-generation VMEM budget (mainly large H on v7x).
    def _w_bytes(tn_):
        return (2 * (h_in * h_mid_p + h_mid_p)          # w1/b1 (<=2 buffers)
                + 2 * (h_mid_p * tn_ + tn_)) * w_isz    # w2/b2 tile (2 buffers)

    w_budget = int(cfg["vmem_cap"] * 0.5)
    n128 = h_out_p // 128
    tn = 128
    for d in range(n128, 0, -1):            # largest divisor tile that fits
        if n128 % d == 0 and _w_bytes(d * 128) <= w_budget:
            tn = d * 128
            break
    # TODO(synk): also K-tile w1 for extremely large h_in (not needed here).

    # Row tile: generation default, clamped by remaining VMEM and pad waste;
    # split so the parallel grid has >=2 steps on 2-TC chips (v7x).
    per_row = (2 * h_in + 2 * tn) * x_isz + (h_mid_p + tn) * 4
    head = max(int(cfg["vmem_cap"] * 0.75) - _w_bytes(tn), 4 << 20)
    tm_cap = min(cfg["row_tile"], max(8, (head // per_row) // 8 * 8))
    if tm is None:
        tm = _pick_row_tile(m, tm_cap, min_grid=cfg["min_grid"])
    else:
        tm = max(8, min(_round_up(tm, 8), _round_up(m, 8)))
    mp = _round_up(m, tm)
    if mp != m:
        x2 = jnp.pad(x2, ((0, mp - m), (0, 0)))

    est = (2 * tm * h_in * x_isz + 2 * tm * tn * x_isz
           + _w_bytes(tn) + tm * (h_mid_p + tn) * 4)
    vmem_limit = int(min(max(est + (8 << 20), 32 << 20), cfg["vmem_cap"]))

    def _call(single_buffer_weights):
        w_mode = ({"pipeline_mode": pl.Buffered(1)}
                  if single_buffer_weights else {})
        w2_mode = w_mode if tn == h_out_p else {}   # w2 varies with j when tiled
        in_specs = [
            pl.BlockSpec((tm, h_in), lambda i, j: (i, 0)),
            pl.BlockSpec((h_in, h_mid_p), lambda i, j: (0, 0), **w_mode),
            pl.BlockSpec((1, h_mid_p), lambda i, j: (0, 0), **w_mode),
            pl.BlockSpec((h_mid_p, tn), lambda i, j: (0, j), **w2_mode),
            pl.BlockSpec((1, tn), lambda i, j: (0, j), **w2_mode),
        ]
        return pl.pallas_call(
            _mlp_kernel,
            out_shape=jax.ShapeDtypeStruct((mp, h_out_p), x.dtype),
            grid=(mp // tm, h_out_p // tn),
            in_specs=in_specs,
            out_specs=pl.BlockSpec((tm, tn), lambda i, j: (i, j)),
            compiler_params=pltpu.CompilerParams(
                dimension_semantics=("parallel", "parallel"),
                vmem_limit_bytes=vmem_limit),
        )(x2, w1, b1, w2, b2)

    try:
        # grid-invariant weights single-buffered -> halves resident-weight VMEM
        out = _call(True)
    except Exception:
        # pipeline_mode=pl.Buffered(1) not supported on this jax/TPU combo
        out = _call(False)

    if mp != m or h_out_p != out_features:
        out = out[:m, :out_features]
    return out.reshape(*orig_shape[:-1], out_features)


# ---------------------------------------------------------------------------
# Parameter init (PyTorch-Linear-style uniform(-1/sqrt(fan_in), +1/sqrt(fan_in)))
# ---------------------------------------------------------------------------
def _init_linear(key, fan_in, fan_out, dtype=jnp.float32):
    kw, kb = jax.random.split(key)
    bound = 1.0 / math.sqrt(fan_in)
    w = jax.random.uniform(kw, (fan_in, fan_out), dtype, -bound, bound)
    b = jax.random.uniform(kb, (fan_out,), dtype, -bound, bound)
    return w, b


def _pad_linear(w, b, *, pad_in=None, pad_out=None, dtype=jnp.bfloat16):
    """Pad a (in, out) weight / (out,) bias to lane-dense shapes once and cast
    to the MXU compute dtype. Returns (w_padded, b_padded shaped (1, out_p))."""
    fi, fo = w.shape
    pi = fi if pad_in is None else pad_in
    po = _round_up(fo, 128) if pad_out is None else pad_out
    w = jnp.pad(w, ((0, pi - fi), (0, po - fo))).astype(dtype)
    b = jnp.pad(b, ((0, po - fo),)).reshape(1, po).astype(dtype)
    return w, b


class PastDecomposableMixingPallas:
    def __init__(self, hidden_size, seq_len, quadkey_level, setting, key,
                 param_dtype=jnp.bfloat16):
        # param_dtype=bfloat16: MXU-native operands with f32 accumulation in the
        # kernel (documented precision/throughput tradeoff; pass jnp.float32 to
        # disable). Weights are padded/cast exactly once here, not per call.
        self.hidden_size = hidden_size
        self.seq_len = seq_len
        h = hidden_size
        h_mid_p = _round_up(h, 128)
        k1, k2, k3, k4 = jax.random.split(key, 4)
        # cross_layer: Linear(H, H) -> GELU -> Linear(H, H)
        w, b = _init_linear(k1, h, h)
        self.cross_w1, self.cross_b1 = _pad_linear(w, b, dtype=param_dtype)
        w, b = _init_linear(k2, h, h)
        self.cross_w2, self.cross_b2 = _pad_linear(w, b, pad_in=h_mid_p,
                                                   dtype=param_dtype)
        # out_cross_layer: Linear(H, H) -> GELU -> Linear(H, 2H)
        w, b = _init_linear(k3, h, h)
        self.out_w1, self.out_b1 = _pad_linear(w, b, dtype=param_dtype)
        w, b = _init_linear(k4, h, 2 * h)
        self.out_w2, self.out_b2 = _pad_linear(w, b, pad_in=h_mid_p,
                                               dtype=param_dtype)
        # TODO(synk): `trend_sample` (self.mixing_trend_sample) is undefined in
        # the reference source; its parameters/compute are not reproducible here.

    # declared submodules (fully defined by __init__), implemented as Pallas kernels
    def cross_layer(self, x):
        return mlp_pallas(x, self.cross_w1, self.cross_b1,
                          self.cross_w2, self.cross_b2,
                          out_features=self.hidden_size)

    def out_cross_layer(self, x):
        return mlp_pallas(x, self.out_w1, self.out_b1,
                          self.out_w2, self.out_b2,
                          out_features=2 * self.hidden_size)

    def _mixing_trend_sample_stub(self, trend_list, season_list,
                                  enc_seq, step, attn_mask, state):
        # TODO(synk): identity stand-in for the undefined `trend_sample` module.
        return trend_list, season_list

    def forward(self, x_list, enc_seq, step, attn_mask, state):
        n = len(x_list)
        # --- decomposition (single Pallas kernel, each scale DMA'd once) ---
        season_list = decompose_pallas(x_list)            # N-1 tensors (B, L, H)
        trend_list = [x_list[i] for i in range(n - 1)]
        trend_list.append(x_list[-1])
        out_list, out_list2 = self._mixing_trend_sample_stub(
            trend_list, season_list, enc_seq, step, attn_mask, state)
        return out_list, out_list2


if __name__ == "__main__":
    B, L, H = 2, 8, 32
    NUM_SCALES = 3

    module = PastDecomposableMixingPallas(
        hidden_size=H, seq_len=L, quadkey_level=4, setting=None,
        key=jax.random.PRNGKey(0))

    xkeys = jax.random.split(jax.random.PRNGKey(1), NUM_SCALES)
    x_list = [jax.random.normal(xkeys[i], (B, L, H), jnp.float32)
              for i in range(NUM_SCALES)]
    enc_seq = jnp.zeros((B, L), jnp.int32)
    step = 0
    attn_mask = jnp.ones((B, L), jnp.float32)
    state = None

    out_list, out_list2 = module.forward(x_list, enc_seq, step, attn_mask, state)

    # exercise the declared MLP submodules (matmul hot path in Pallas)
    y_cross = module.cross_layer(x_list[0])          # (B, L, H)
    y_out_cross = module.out_cross_layer(x_list[0])  # (B, L, 2H)

    jax.block_until_ready((out_list, out_list2, y_cross, y_out_cross))

    # --- correctness checks vs pure-JAX references ---
    season_ref = [x_list[i + 1] - x_list[i] for i in range(NUM_SCALES - 1)]
    for got, ref in zip(out_list2, season_ref):
        assert got.shape == ref.shape
        assert jnp.allclose(got, ref, atol=1e-6), "decompose mismatch"

    def _ref_mlp(x, w1, b1, w2, b2, out_features):
        cd = w1.dtype
        h = jnp.dot(x.astype(cd), w1, preferred_element_type=jnp.float32)
        h = h + b1.astype(jnp.float32)
        h = 0.5 * h * (1.0 + jax.lax.erf(h / math.sqrt(2.0)))
        o = jnp.dot(h.astype(cd), w2, preferred_element_type=jnp.float32)
        o = o + b2.astype(jnp.float32)
        return o[..., :out_features].astype(x.dtype)

    ref_cross = _ref_mlp(x_list[0], module.cross_w1, module.cross_b1,
                         module.cross_w2, module.cross_b2, H)
    ref_out = _ref_mlp(x_list[0], module.out_w1, module.out_b1,
                       module.out_w2, module.out_b2, 2 * H)
    assert y_cross.shape == (B, L, H)
    assert y_out_cross.shape == (B, L, 2 * H)
    assert jnp.allclose(y_cross, ref_cross, atol=2e-2, rtol=2e-2), \
        "cross_layer mismatch"
    assert jnp.allclose(y_out_cross, ref_out, atol=2e-2, rtol=2e-2), \
        "out_cross_layer mismatch"

    print("KERNEL_OK")
</pallas_src>

<mosaic_0001>
module attributes {stable_mosaic.version = 11 : i64} {
  func.func @_decompose_kernel(%arg0: i32, %arg1: memref<4x128xf32, #tpu.memory_space<vmem>>, %arg2: memref<4x128xf32, #tpu.memory_space<vmem>>, %arg3: memref<4x128xf32, #tpu.memory_space<vmem>>, %arg4: memref<4x128xf32, #tpu.memory_space<vmem>>, %arg5: memref<4x128xf32, #tpu.memory_space<vmem>>) attributes {dimension_semantics = [#tpu.dimension_semantics<parallel>], iteration_bounds = array<i64: 1>, scalar_prefetch = 0 : i64, scratch_operands = 0 : i64, tpu.core_type = #tpu.core_type<tc>, window_params = [{transform_indices = @transform_0, window_bounds = array<i64: 4, 128>}, {transform_indices = @transform_1, window_bounds = array<i64: 4, 128>}, {transform_indices = @transform_2, window_bounds = array<i64: 4, 128>}, {transform_indices = @transform_3, window_bounds = array<i64: 4, 128>}, {transform_indices = @transform_4, window_bounds = array<i64: 4, 128>}]} {
    %c0 = arith.constant 0 : index
    %c0_0 = arith.constant 0 : index
    %0 = vector.load %arg2[%c0, %c0_0] : memref<4x128xf32, #tpu.memory_space<vmem>>, vector<4x128xf32>
    %c0_1 = arith.constant 0 : index
    %c0_2 = arith.constant 0 : index
    %1 = vector.load %arg1[%c0_1, %c0_2] : memref<4x128xf32, #tpu.memory_space<vmem>>, vector<4x128xf32>
    %2 = arith.subf %0, %1 : vector<4x128xf32>
    %c0_3 = arith.constant 0 : index
    %c0_4 = arith.constant 0 : index
    %3 = vector.load %arg4[%c0_3, %c0_4] : memref<4x128xf32, #tpu.memory_space<vmem>>, vector<4x128xf32>
    tpu.vector_store %arg4[%c0_3, %c0_4], %2 {strides = array<i32>} : memref<4x128xf32, #tpu.memory_space<vmem>>, vector<4x128xf32>,
    %c0_5 = arith.constant 0 : index
    %c0_6 = arith.constant 0 : index
    %4 = vector.load %arg3[%c0_5, %c0_6] : memref<4x128xf32, #tpu.memory_space<vmem>>, vector<4x128xf32>
    %c0_7 = arith.constant 0 : index
    %c0_8 = arith.constant 0 : index
    %5 = vector.load %arg2[%c0_7, %c0_8] : memref<4x128xf32, #tpu.memory_space<vmem>>, vector<4x128xf32>
    %6 = arith.subf %4, %5 : vector<4x128xf32>
    %c0_9 = arith.constant 0 : index
    %c0_10 = arith.constant 0 : index
    %7 = vector.load %arg5[%c0_9, %c0_10] : memref<4x128xf32, #tpu.memory_space<vmem>>, vector<4x128xf32>
    tpu.vector_store %arg5[%c0_9, %c0_10], %6 {strides = array<i32>} : memref<4x128xf32, #tpu.memory_space<vmem>>, vector<4x128xf32>,
    return
  }
  func.func @transform_0(%arg0: i32) -> (i32, i32) {
    %c0_i32 = arith.constant 0 : i32
    %c0_i32_0 = arith.constant 0 : i32
    return %arg0, %c0_i32 : i32, i32
  }
  func.func @transform_1(%arg0: i32) -> (i32, i32) {
    %c0_i32 = arith.constant 0 : i32
    %c0_i32_0 = arith.constant 0 : i32
    return %arg0, %c0_i32 : i32, i32
  }
  func.func @transform_2(%arg0: i32) -> (i32, i32) {
    %c0_i32 = arith.constant 0 : i32
    %c0_i32_0 = arith.constant 0 : i32
    return %arg0, %c0_i32 : i32, i32
  }
  func.func @transform_3(%arg0: i32) -> (i32, i32) {
    %c0_i32 = arith.constant 0 : i32
    %c0_i32_0 = arith.constant 0 : i32
    return %arg0, %c0_i32 : i32, i32
  }
  func.func @transform_4(%arg0: i32) -> (i32, i32) {
    %c0_i32 = arith.constant 0 : i32
    %c0_i32_0 = arith.constant 0 : i32
    return %arg0, %c0_i32 : i32, i32
  }
}

</mosaic_0001>

<llo_original>
// kernel: tpu_custom_call.1
$region0: #{tpu_custom_call.1}
  #allocation0 [shape = 'u32[]', space=smem, size = 0x4, offset = 0x4, fixed_abs, tag = 'smem constant byte address 0x4 - core index']
  #allocation1 [shape = 'u32[144,128]{1,0:T(1,128)}', space=vmem, size = 0x12000, scoped, tag = 'internal scratch']
  %s0 = inlined_call_operand.hbm [shape: f32[4,128], index: 0, kind: input, shape index: {}]
  %s1 = inlined_call_operand.hbm [shape: f32[4,128], index: 1, kind: input, shape index: {}]
  %s2 = inlined_call_operand.vmem [shape: f32[4,128], index: 2, kind: input, shape index: {}]
  %s3 = inlined_call_operand.hbm [shape: f32[4,128], index: 3, kind: output, shape index: {0}]
  %s4 = inlined_call_operand.hbm [shape: f32[4,128], index: 4, kind: output, shape index: {1}]
  %5 = xla_tuple %s3, %s4
  %s6 = sld [smem:[#allocation0]]
  $region38: #{tpu_custom_call.1} parent=0
    _
  %s8 = ssub.s32 1, %s6
  %s9 = scalar_select 0, %s8, %s6
  $region1: #{tpu_custom_call.1} parent=0
    #allocation2 [shape = 'u8[2048]{0}', space=vmem, size = 0x800, scoped, tag = 'input window, operand 0, single buffered']
    #allocation3 [shape = 's32[1]{0}', space=sflag, size = 0x4, scoped, tag = 'scoped memory for tpu_custom_call.1']
    #allocation4 [shape = 's32[1]{0}', space=sflag, size = 0x4, scoped, tag = 'scoped memory for tpu_custom_call.1']
    #allocation5 [shape = 'u8[2048]{0}', space=vmem, size = 0x800, scoped, tag = 'input window, operand 1, single buffered']
    #allocation6 [shape = 's32[1]{0}', space=sflag, size = 0x4, scoped, tag = 'scoped memory for tpu_custom_call.1']
    #allocation7 [shape = 'u8[2048]{0}', space=vmem, size = 0x800, scoped, tag = 'output window, operand 0, single buffered']
    #allocation8 [shape = 'u8[2048]{0}', space=vmem, size = 0x800, scoped, tag = 'output window, operand 1, single buffered']
    #allocation9 [shape = 's32[1]{0}', space=sflag, size = 0x4, scoped, tag = 'scoped memory for tpu_custom_call.1']
    %10 = vsyncpa [#allocation3], 0
    %11 = vsyncpa [#allocation6], 0
    %12 = vsyncpa [#allocation4], 0
    %13 = vsyncpa [#allocation9], 0
    // Predicated region
    $region2: #{tpu_custom_call.1} parent=1 // pred_check
      _
    $region3: #{tpu_custom_call.1} parent=1 // pred_check_branch
      %15 = sbr.rel (0) target = $region5
    $region4: #{tpu_custom_call.1} parent=1 // pred_region
      %s17 = ssub.s32 64, 64
      %18 = vsyncadd [#allocation3], %s17
      %s20 = sshll.u32 [#allocation2], 4
      %s21 = int_to_ptr.vmem [resolvable:$true] %s20
      %23 = dma.hbm_to_vmem [thread:$0]  %s0, 64, %s21, [#allocation3]
    $region5: #{tpu_custom_call.1} parent=1 // pred_fallthru
      _
    // Predicated region
    $region6: #{tpu_custom_call.1} parent=1 // pred_check
      _
    $region7: #{tpu_custom_call.1} parent=1 // pred_check_branch
      %25 = sbr.rel (0) target = $region9
    $region8: #{tpu_custom_call.1} parent=1 // pred_region
      %s27 = ssub.s32 64, 64
      %28 = vsyncadd [#allocation6], %s27
      %s30 = sshll.u32 [#allocation5], 4
      %s31 = int_to_ptr.vmem [resolvable:$true] %s30
      %33 = dma.hbm_to_vmem [thread:$0]  %s1, 64, %s31, [#allocation6]
    $region9: #{tpu_custom_call.1} parent=1 // pred_fallthru
      _
    // Predicated region
    $region10: #{tpu_custom_call.1} parent=1 // pred_check
      _
    $region11: #{tpu_custom_call.1} parent=1 // pred_check_branch
      %35 = sbr.rel (0) target = $region13
    $region12: #{tpu_custom_call.1} parent=1 // pred_region
      _
    $region13: #{tpu_custom_call.1} parent=1 // pred_fallthru
      _
    // Predicated region
    $region14: #{tpu_custom_call.1} parent=1 // pred_check
      _
    $region15: #{tpu_custom_call.1} parent=1 // pred_check_branch
      %37 = sbr.rel (0) target = $region17
    $region16: #{tpu_custom_call.1} parent=1 // pred_region
      %38 = dma.done [#allocation3], 64
    $region17: #{tpu_custom_call.1} parent=1 // pred_fallthru
      _
    // Predicated region
    $region18: #{tpu_custom_call.1} parent=1 // pred_check
      _
    $region19: #{tpu_custom_call.1} parent=1 // pred_check_branch
      %40 = sbr.rel (0) target = $region21
    $region20: #{tpu_custom_call.1} parent=1 // pred_region
      %41 = dma.done [#allocation6], 64
    $region21: #{tpu_custom_call.1} parent=1 // pred_fallthru
      _
    %v42 = vld [vmem:[#allocation5] sm:$0xf]
    %v43 = vld [vmem:[#allocation2] sm:$0xf]
    %v44 = vsub.f32 %v42, %v43
    %45 = vst [vmem:[#allocation7] sm:$0xf] %v44
    %v46 = vld [vmem:[%s2] sm:$0xf]
    %v47 = vld [vmem:[#allocation5] sm:$0xf]
    %v48 = vsub.f32 %v46, %v47
    %49 = vst [vmem:[#allocation8] sm:$0xf] %v48
    // Predicated region
    $region22: #{tpu_custom_call.1} parent=1 // pred_check
      _
    $region23: #{tpu_custom_call.1} parent=1 // pred_check_branch
      %51 = sbr.rel (0) target = $region25
    $region24: #{tpu_custom_call.1} parent=1 // pred_region
      %s53 = ssub.s32 64, 64
      %54 = vsyncadd [#allocation4], %s53
      %s56 = sshll.u32 [#allocation7], 4
      %s57 = int_to_ptr.vmem [resolvable:$true] %s56
      %59 = dma.vmem_to_hbm [thread:$0]  %s57, 64, %s3, [#allocation4]
    $region25: #{tpu_custom_call.1} parent=1 // pred_fallthru
      _
    // Predicated region
    $region26: #{tpu_custom_call.1} parent=1 // pred_check
      _
    $region27: #{tpu_custom_call.1} parent=1 // pred_check_branch
      %61 = sbr.rel (0) target = $region29
    $region28: #{tpu_custom_call.1} parent=1 // pred_region
      %s63 = ssub.s32 64, 64
      %64 = vsyncadd [#allocation9], %s63
      %s66 = sshll.u32 [#allocation8], 4
      %s67 = int_to_ptr.vmem [resolvable:$true] %s66
      %69 = dma.vmem_to_hbm [thread:$0]  %s67, 64, %s4, [#allocation9]
    $region29: #{tpu_custom_call.1} parent=1 // pred_fallthru
      _
    // Predicated region
    $region30: #{tpu_custom_call.1} parent=1 // pred_check
      _
    $region31: #{tpu_custom_call.1} parent=1 // pred_check_branch
      %71 = sbr.rel (0) target = $region33
    $region32: #{tpu_custom_call.1} parent=1 // pred_region
      %72 = dma.done [#allocation4], 64
    $region33: #{tpu_custom_call.1} parent=1 // pred_fallthru
      _
    // Predicated region
    $region34: #{tpu_custom_call.1} parent=1 // pred_check
      _
    $region35: #{tpu_custom_call.1} parent=1 // pred_check_branch
      %74 = sbr.rel (0) target = $region37
    $region36: #{tpu_custom_call.1} parent=1 // pred_region
      %75 = dma.done [#allocation9], 64
    $region37: #{tpu_custom_call.1} parent=1 // pred_fallthru
      _
    %76 = vsyncpa [#allocation3], 1
    %77 = vsyncpa [#allocation6], 1
    %78 = vsyncpa [#allocation4], 1
    %79 = vsyncpa [#allocation9], 1

</llo_original>
